<compile_context>
chip_gen: v5e
topology: v5e:2x2
jax: 0.10.0
libtpu: 0.0.40
codegen_flags: <defaults>
</compile_context>

<pallas_src>
import jax
import jax.numpy as jnp
from jax import lax
from jax.experimental import pallas as pl
from jax.experimental.pallas import tpu as pltpu


def _downsampler_kernel(planes_ref, halo_ref, mask_ref, w_shift_ref,
                        w_plain_ref, scale_pool_ref, shift_ref, o_ref):
    """One (batch, output-row-tile) grid step, channel-planar layout.

    planes_ref : (1, 4*Cin, NT) bf16 parity planes [ee, eo, oe, oo],
                                NT = TH*Wout flattened output pixels
    halo_ref   : (1, 1, 2*Cin, Wout) bf16 odd-row parity row just above the
                                tile, [oe; oo] (zeros for the first tile)
    mask_ref   : (1, NT)        bf16 left-shift mask: 0.0 at column 0, else 1.0
    w_shift_ref: (Cconv, 5*Cin) bf16 conv weights of the 5 shifted taps
                                [up(left(oo)), up(oe), up(oo), left(eo), left(oo)]
    w_plain_ref: (Cconv, 4*Cin) bf16 conv weights of the 4 plain taps
                                [ee, eo, oe, oo] (BN scale folded in)
    scale_pool_ref: (Cin, 1)    f32 BN scale for the max-pool channels
    shift_ref  : (Cout, 1)      f32 folded BN shift (+ conv bias) per channel
    o_ref      : (1, Cout, NT)  f32 output slab (channel-planar == NCHW)
    """
    cin = planes_ref.shape[1] // 4
    nt = planes_ref.shape[2]
    wout = halo_ref.shape[3]
    cconv = w_plain_ref.shape[0]

    # Plain parity planes, read straight from the VMEM block.
    ee = planes_ref[0, 0 * cin:1 * cin, :]
    eo = planes_ref[0, 1 * cin:2 * cin, :]
    oe = planes_ref[0, 2 * cin:3 * cin, :]
    oo = planes_ref[0, 3 * cin:4 * cin, :]

    # ---- 2x2 / stride-2 max pool: full-lane VPU max (exact in bf16) ----
    pool = jnp.maximum(jnp.maximum(ee, eo), jnp.maximum(oe, oo))

    # ---- rebuild the 5 shifted conv taps on-chip (no HBM materialization) ----
    halo = halo_ref[0, 0]                       # (2*Cin, Wout)
    halo_oe = halo[0:cin, :]
    halo_oo = halo[cin:2 * cin, :]
    mask = mask_ref[...]                        # (1, NT), broadcasts over Cin

    # up(p)[t, :] = p[t-1, :]; row 0 of the tile comes from the halo row.
    if nt > wout:
        up_oe = jnp.concatenate([halo_oe, oe[:, :nt - wout]], axis=1)
        up_oo = jnp.concatenate([halo_oo, oo[:, :nt - wout]], axis=1)
    else:                                       # single-row tile
        up_oe, up_oo = halo_oe, halo_oo

    zcol = jnp.zeros((cin, 1), dtype=ee.dtype)

    def left(p):                                # left(p)[t, j] = p[t, j-1], 0 at j==0
        return jnp.concatenate([zcol, p[:, :nt - 1]], axis=1) * mask

    shifted = jnp.concatenate(
        [left(up_oo), up_oe, up_oo, left(eo), left(oo)], axis=0)   # (5*Cin, NT)

    # ---- 3x3 / stride-2 conv: two MXU matmuls, f32 accumulation ----
    conv = jnp.dot(w_shift_ref[...], shifted,
                   preferred_element_type=jnp.float32)
    conv = conv + jnp.dot(w_plain_ref[...], planes_ref[0],
                          preferred_element_type=jnp.float32)

    # ---- folded BN/bias + ReLU, lane-dense channel-planar stores ----
    shift = shift_ref[...]                                          # (Cout, 1)
    o_ref[0, 0:cconv, :] = jnp.maximum(
        conv + shift[0:cconv], 0.0).astype(o_ref.dtype)
    o_ref[0, cconv:, :] = jnp.maximum(
        pool.astype(jnp.float32) * scale_pool_ref[...] + shift[cconv:],
        0.0).astype(o_ref.dtype)


def _vmem_capacity_bytes():
    """Physical per-core VMEM (128 MiB on v5e/v6e, 64 MiB per TC on v7x)."""
    try:
        cap = getattr(pltpu.get_tpu_info(), "vmem_capacity_bytes", None)
        if cap:
            return int(cap)
    except Exception:
        pass
    return 64 << 20          # conservative default (v7x per-TensorCore)


def _step_vmem_bytes(th, wout, cin, cout):
    """Double-buffered VMEM footprint of one grid step."""
    nt = th * wout
    in_b = 4 * cin * nt * 2 + 2 * cin * wout * 2 + nt * 2   # planes+halo+mask (bf16)
    out_b = cout * nt * 4                                    # f32 output slab
    return 2 * (in_b + out_b)


def _pick_row_tile(hout, wout, cin, cout, budget_bytes, prefer_multi_tile):
    """Largest output-row tile TH that divides Hout, keeps the lane dim
    (TH*Wout) 128-aligned (or full), and fits the per-step VMEM budget.
    No full-image fallback past the budget: if nothing fits we take the
    smallest *legal* tile instead (robust on v7x's 64 MiB VMEM)."""
    cands = [t for t in range(1, hout + 1)
             if hout % t == 0 and ((t * wout) % 128 == 0 or t == hout)]
    if prefer_multi_tile:                      # keep both v7x cores busy
        multi = [t for t in cands if hout // t >= 2]
        if multi:
            cands = multi
    fits = [t for t in cands
            if _step_vmem_bytes(t, wout, cin, cout) <= budget_bytes]
    return max(fits) if fits else min(cands)


def downsampler_block(x_nchw, w_hwio, bias, gamma, beta, run_mean, run_var,
                      eps=1e-3):
    """x_nchw: (B, Cin, H, W) float32.  Returns (B, Cout, H//2, W//2) float32."""
    B, Cin, H, W = x_nchw.shape
    if H % 2 or W % 2:
        raise ValueError(f"DownsamplerBlock requires even H, W (got {H}x{W})")
    Cconv = w_hwio.shape[-1]
    Cout = Cconv + Cin
    Hout, Wout = H // 2, W // 2
    N = Hout * Wout

    x = x_nchw.astype(jnp.float32)

    # ---- one-time parity de-interleave (exactly 1.0x the input pixels) ----
    ee = x[:, :, 0::2, 0::2]                      # (B, Cin, Hout, Wout)
    eo = x[:, :, 0::2, 1::2]
    oe = x[:, :, 1::2, 0::2]
    oo = x[:, :, 1::2, 1::2]
    planes = jnp.concatenate([ee, eo, oe, oo], axis=1)       # (B, 4*Cin, Hout, Wout)
    planes = planes.reshape(B, 4 * Cin, N).astype(jnp.bfloat16)

    # ---- generation-aware tiling / scoped-VMEM policy ----
    cap = _vmem_capacity_bytes()
    limit_ceiling = min((cap * 3) // 4, 96 << 20)
    TH = _pick_row_tile(Hout, Wout, Cin, Cout,
                        budget_bytes=limit_ceiling // 2,
                        prefer_multi_tile=(B == 1))
    RT = Hout // TH
    NT = TH * Wout

    # ---- per-tile halo: odd-row parity row just above each row tile ----
    odd = jnp.concatenate([oe, oo], axis=1)                   # (B, 2*Cin, Hout, Wout)
    halo = jnp.pad(odd, ((0, 0), (0, 0), (1, 0), (0, 0)))[:, :, 0:Hout:TH, :]
    halo = jnp.transpose(halo, (0, 2, 1, 3)).astype(jnp.bfloat16)  # (B, RT, 2*Cin, Wout)

    # ---- column-0 mask for the in-kernel left shifts (constant index_map ->
    #      fetched once, ~zero HBM traffic) ----
    mask_row = jnp.concatenate(
        [jnp.zeros((1, 1), jnp.bfloat16), jnp.ones((1, Wout - 1), jnp.bfloat16)],
        axis=1)
    mask = jnp.tile(mask_row, (1, TH))                        # (1, NT)

    # ---- conv weights: (3,3,Cin,Cconv) -> (Cconv, 9*Cin) in (kh,kw,ci) tap
    #      order, BN scale for conv channels folded in, split into the
    #      shifted-tap and plain-tap groups used by the kernel ----
    scale = gamma / jnp.sqrt(run_var + eps)                   # (Cout,)
    w9 = jnp.transpose(w_hwio.reshape(9 * Cin, Cconv)) * scale[:Cconv, None]
    shift_taps = (0, 1, 2, 3, 6)   # up(left(oo)), up(oe), up(oo), left(eo), left(oo)
    plain_taps = (4, 5, 7, 8)      # ee, eo, oe, oo
    w_shift = jnp.concatenate(
        [w9[:, k * Cin:(k + 1) * Cin] for k in shift_taps],
        axis=1).astype(jnp.bfloat16)
    w_plain = jnp.concatenate(
        [w9[:, k * Cin:(k + 1) * Cin] for k in plain_taps],
        axis=1).astype(jnp.bfloat16)

    # ---- fold conv bias + inference BatchNorm into a per-channel shift; pool
    #      channels keep a separate scale (gamma may be negative, so it cannot
    #      be folded through the max) ----
    # TODO(synk): training-mode BatchNorm (batch stats + running-stat update)
    # has no clean single-kernel equivalent here; inference form only.
    shift = beta - run_mean * scale
    shift = jnp.concatenate([shift[:Cconv] + scale[:Cconv] * bias, shift[Cconv:]])
    shift_col = shift.reshape(Cout, 1).astype(jnp.float32)
    scale_pool = scale[Cconv:].reshape(Cin, 1).astype(jnp.float32)

    # ---- explicit scoped-VMEM limit (stays below physical on every gen) ----
    need = _step_vmem_bytes(TH, Wout, Cin, Cout) \
        + (w_shift.size + w_plain.size) * 2 + (Cout + Cin) * 4
    vmem_limit = int(min(max(32 << 20, 2 * need), limit_ceiling))
    vmem_limit = int(min(max(vmem_limit, need + (4 << 20)), (cap * 9) // 10))

    out_packed = pl.pallas_call(
        _downsampler_kernel,
        out_shape=jax.ShapeDtypeStruct((B, Cout, N), jnp.float32),
        grid_spec=pltpu.PrefetchScalarGridSpec(
            num_scalar_prefetch=0,
            grid=(B, RT),
            in_specs=[
                pl.BlockSpec((1, 4 * Cin, NT), lambda b, r: (b, 0, r)),
                pl.BlockSpec((1, 1, 2 * Cin, Wout), lambda b, r: (b, r, 0, 0)),
                pl.BlockSpec((1, NT), lambda b, r: (0, 0)),
                pl.BlockSpec((Cconv, 5 * Cin), lambda b, r: (0, 0)),
                pl.BlockSpec((Cconv, 4 * Cin), lambda b, r: (0, 0)),
                pl.BlockSpec((Cin, 1), lambda b, r: (0, 0)),
                pl.BlockSpec((Cout, 1), lambda b, r: (0, 0)),
            ],
            out_specs=pl.BlockSpec((1, Cout, NT), lambda b, r: (b, 0, r)),
        ),
        compiler_params=pltpu.CompilerParams(
            dimension_semantics=("parallel", "parallel"),
            vmem_limit_bytes=vmem_limit),
    )(planes, halo, mask, w_shift, w_plain, scale_pool, shift_col)

    # channel-planar result is already NCHW; just un-flatten the pixel axis.
    return out_packed.reshape(B, Cout, Hout, Wout)


def _reference(x_nchw, w_hwio, bias, gamma, beta, run_mean, run_var, eps=1e-3):
    """Plain-JAX f32 reference mirroring the PyTorch forward (eval-mode BN)."""
    w_oihw = jnp.transpose(w_hwio, (3, 2, 0, 1))
    conv = lax.conv_general_dilated(
        x_nchw, w_oihw, window_strides=(2, 2),
        padding=((1, 1), (1, 1)),
        dimension_numbers=("NCHW", "OIHW", "NCHW"),
    ) + bias[None, :, None, None]
    pool = lax.reduce_window(
        x_nchw, -jnp.inf, lax.max,
        window_dimensions=(1, 1, 2, 2), window_strides=(1, 1, 2, 2),
        padding="VALID",
    )
    y = jnp.concatenate([conv, pool], axis=1)
    y = (y - run_mean[None, :, None, None]) / jnp.sqrt(
        run_var[None, :, None, None] + eps)
    y = y * gamma[None, :, None, None] + beta[None, :, None, None]
    return jnp.maximum(y, 0.0)


if __name__ == "__main__":
    # Small deterministic config: ninput=4, noutput=16, 2x4x16x16 input.
    B, Cin, H, W = 2, 4, 16, 16
    Cout = 16
    Cconv = Cout - Cin

    key = jax.random.PRNGKey(0)
    k_x, k_w, k_b, k_g, k_be, k_m, k_v = jax.random.split(key, 7)

    x = jax.random.normal(k_x, (B, Cin, H, W), dtype=jnp.float32)
    w_hwio = 0.1 * jax.random.normal(k_w, (3, 3, Cin, Cconv), dtype=jnp.float32)
    bias = 0.1 * jax.random.normal(k_b, (Cconv,), dtype=jnp.float32)
    gamma = 1.0 + 0.1 * jax.random.normal(k_g, (Cout,), dtype=jnp.float32)
    beta = 0.1 * jax.random.normal(k_be, (Cout,), dtype=jnp.float32)
    run_mean = 0.1 * jax.random.normal(k_m, (Cout,), dtype=jnp.float32)
    run_var = jnp.abs(1.0 + 0.1 * jax.random.normal(k_v, (Cout,),
                                                    dtype=jnp.float32))

    out = downsampler_block(x, w_hwio, bias, gamma, beta, run_mean, run_var)
    out = jax.block_until_ready(out)

    ref = _reference(x, w_hwio, bias, gamma, beta, run_mean, run_var)
    assert out.shape == (B, Cout, H // 2, W // 2), out.shape
    err = float(jnp.max(jnp.abs(out - ref)))
    # bf16 input planes / weights vs the f32 reference -> relaxed tolerance.
    assert err < 5e-2, err

    print("KERNEL_OK")
</pallas_src>

<mosaic_0001>
module attributes {stable_mosaic.version = 11 : i64} {
  func.func @_downsampler_kernel(%arg0: i32, %arg1: i32, %arg2: memref<1x16x64xbf16, #tpu.memory_space<vmem>>, %arg3: memref<1x1x8x8xbf16, #tpu.memory_space<vmem>>, %arg4: memref<1x64xbf16, #tpu.memory_space<vmem>>, %arg5: memref<12x20xbf16, #tpu.memory_space<vmem>>, %arg6: memref<12x16xbf16, #tpu.memory_space<vmem>>, %arg7: memref<4x1xf32, #tpu.memory_space<vmem>>, %arg8: memref<16x1xf32, #tpu.memory_space<vmem>>, %arg9: memref<1x16x64xf32, #tpu.memory_space<vmem>>) attributes {dimension_semantics = [#tpu.dimension_semantics<parallel>, #tpu.dimension_semantics<parallel>], iteration_bounds = array<i64: 2, 1>, scalar_prefetch = 0 : i64, scratch_operands = 0 : i64, tpu.core_type = #tpu.core_type<tc>, window_params = [{transform_indices = @transform_0, window_bounds = array<i64: 1, 16, 64>}, {transform_indices = @transform_1, window_bounds = array<i64: 1, 1, 8, 8>}, {pipeline_mode = #tpu.pipeline_mode<synchronous>, transform_indices = @transform_2, window_bounds = array<i64: 1, 64>}, {pipeline_mode = #tpu.pipeline_mode<synchronous>, transform_indices = @transform_3, window_bounds = array<i64: 12, 20>}, {pipeline_mode = #tpu.pipeline_mode<synchronous>, transform_indices = @transform_4, window_bounds = array<i64: 12, 16>}, {pipeline_mode = #tpu.pipeline_mode<synchronous>, transform_indices = @transform_5, window_bounds = array<i64: 4, 1>}, {pipeline_mode = #tpu.pipeline_mode<synchronous>, transform_indices = @transform_6, window_bounds = array<i64: 16, 1>}, {transform_indices = @transform_7, window_bounds = array<i64: 1, 16, 64>}]} {
    %c0 = arith.constant 0 : index
    %c0_0 = arith.constant 0 : index
    %c0_1 = arith.constant 0 : index
    %0 = vector.load %arg2[%c0, %c0_0, %c0_1] : memref<1x16x64xbf16, #tpu.memory_space<vmem>>, vector<1x4x64xbf16>
    %1 = vector.shape_cast %0 : vector<1x4x64xbf16> to vector<4x64xbf16>
    %c0_2 = arith.constant 0 : index
    %c4 = arith.constant 4 : index
    %c0_3 = arith.constant 0 : index
    %2 = vector.load %arg2[%c0_2, %c4, %c0_3] : memref<1x16x64xbf16, #tpu.memory_space<vmem>>, vector<1x4x64xbf16>
    %3 = vector.shape_cast %2 : vector<1x4x64xbf16> to vector<4x64xbf16>
    %c0_4 = arith.constant 0 : index
    %c8 = arith.constant 8 : index
    %c0_5 = arith.constant 0 : index
    %4 = vector.load %arg2[%c0_4, %c8, %c0_5] : memref<1x16x64xbf16, #tpu.memory_space<vmem>>, vector<1x4x64xbf16>
    %5 = vector.shape_cast %4 : vector<1x4x64xbf16> to vector<4x64xbf16>
    %c0_6 = arith.constant 0 : index
    %c12 = arith.constant 12 : index
    %c0_7 = arith.constant 0 : index
    %6 = vector.load %arg2[%c0_6, %c12, %c0_7] : memref<1x16x64xbf16, #tpu.memory_space<vmem>>, vector<1x4x64xbf16>
    %7 = vector.shape_cast %6 : vector<1x4x64xbf16> to vector<4x64xbf16>
    %8 = arith.maximumf %1, %3 : vector<4x64xbf16>
    %9 = arith.maximumf %5, %7 : vector<4x64xbf16>
    %10 = arith.maximumf %8, %9 : vector<4x64xbf16>
    %c0_8 = arith.constant 0 : index
    %c0_9 = arith.constant 0 : index
    %c0_10 = arith.constant 0 : index
    %c0_11 = arith.constant 0 : index
    %11 = vector.load %arg3[%c0_8, %c0_9, %c0_10, %c0_11] : memref<1x1x8x8xbf16, #tpu.memory_space<vmem>>, vector<1x1x8x8xbf16>
    %12 = vector.shape_cast %11 : vector<1x1x8x8xbf16> to vector<8x8xbf16>
    %13 = vector.extract_strided_slice %12 {offsets = [0, 0], sizes = [4, 8], strides = [1, 1]} : vector<8x8xbf16> to vector<4x8xbf16>
    %14 = vector.extract_strided_slice %12 {offsets = [4, 0], sizes = [4, 8], strides = [1, 1]} : vector<8x8xbf16> to vector<4x8xbf16>
    %c0_12 = arith.constant 0 : index
    %c0_13 = arith.constant 0 : index
    %15 = vector.load %arg4[%c0_12, %c0_13] : memref<1x64xbf16, #tpu.memory_space<vmem>>, vector<1x64xbf16>
    %16 = vector.extract_strided_slice %5 {offsets = [0, 0], sizes = [4, 56], strides = [1, 1]} : vector<4x64xbf16> to vector<4x56xbf16>
    %17 = tpu.concatenate %13, %16 in 1 : vector<4x8xbf16>, vector<4x56xbf16> -> vector<4x64xbf16>
    %18 = vector.extract_strided_slice %7 {offsets = [0, 0], sizes = [4, 56], strides = [1, 1]} : vector<4x64xbf16> to vector<4x56xbf16>
    %19 = tpu.concatenate %14, %18 in 1 : vector<4x8xbf16>, vector<4x56xbf16> -> vector<4x64xbf16>
    %cst = arith.constant 0.000000e+00 : bf16
    %20 = vector.broadcast %cst : bf16 to vector<4x1xbf16>
    %21 = vector.extract_strided_slice %19 {offsets = [0, 0], sizes = [4, 63], strides = [1, 1]} : vector<4x64xbf16> to vector<4x63xbf16>
    %22 = tpu.concatenate %20, %21 in 1 : vector<4x1xbf16>, vector<4x63xbf16> -> vector<4x64xbf16>
    %23 = vector.broadcast %15 : vector<1x64xbf16> to vector<4x64xbf16>
    %24 = arith.mulf %22, %23 : vector<4x64xbf16>
    %25 = vector.extract_strided_slice %3 {offsets = [0, 0], sizes = [4, 63], strides = [1, 1]} : vector<4x64xbf16> to vector<4x63xbf16>
    %26 = tpu.concatenate %20, %25 in 1 : vector<4x1xbf16>, vector<4x63xbf16> -> vector<4x64xbf16>
    %27 = vector.broadcast %15 : vector<1x64xbf16> to vector<4x64xbf16>
    %28 = arith.mulf %26, %27 : vector<4x64xbf16>
    %29 = vector.extract_strided_slice %7 {offsets = [0, 0], sizes = [4, 63], strides = [1, 1]} : vector<4x64xbf16> to vector<4x63xbf16>
    %30 = tpu.concatenate %20, %29 in 1 : vector<4x1xbf16>, vector<4x63xbf16> -> vector<4x64xbf16>
    %31 = vector.broadcast %15 : vector<1x64xbf16> to vector<4x64xbf16>
    %32 = arith.mulf %30, %31 : vector<4x64xbf16>
    %33 = tpu.concatenate %24, %17, %19, %28, %32 in 0 : vector<4x64xbf16>, vector<4x64xbf16>, vector<4x64xbf16>, vector<4x64xbf16>, vector<4x64xbf16> -> vector<20x64xbf16>
    %c0_14 = arith.constant 0 : index
    %c0_15 = arith.constant 0 : index
    %34 = vector.load %arg5[%c0_14, %c0_15] : memref<12x20xbf16, #tpu.memory_space<vmem>>, vector<12x20xbf16>
    %cst_16 = arith.constant dense<0.000000e+00> : vector<12x64xf32>
    %35 = tpu.matmul %34, %33, %cst_16 {dimension_numbers = #tpu.dot_dimension_numbers<[1], [0], [0], [1], [0, 0, 1, 1], [], []>} : vector<12x20xbf16>, vector<20x64xbf16>, vector<12x64xf32> -> vector<12x64xf32>
    %c0_17 = arith.constant 0 : index
    %c0_18 = arith.constant 0 : index
    %36 = vector.load %arg6[%c0_17, %c0_18] : memref<12x16xbf16, #tpu.memory_space<vmem>>, vector<12x16xbf16>
    %c0_19 = arith.constant 0 : index
    %c0_20 = arith.constant 0 : index
    %c0_21 = arith.constant 0 : index
    %37 = vector.load %arg2[%c0_19, %c0_20, %c0_21] : memref<1x16x64xbf16, #tpu.memory_space<vmem>>, vector<1x16x64xbf16>
    %38 = vector.shape_cast %37 : vector<1x16x64xbf16> to vector<16x64xbf16>
    %cst_22 = arith.constant dense<0.000000e+00> : vector<12x64xf32>
    %39 = tpu.matmul %36, %38, %cst_22 {dimension_numbers = #tpu.dot_dimension_numbers<[1], [0], [0], [1], [0, 0, 1, 1], [], []>} : vector<12x16xbf16>, vector<16x64xbf16>, vector<12x64xf32> -> vector<12x64xf32>
    %40 = arith.addf %35, %39 : vector<12x64xf32>
    %c0_23 = arith.constant 0 : index
    %c0_24 = arith.constant 0 : index
    %41 = vector.load %arg8[%c0_23, %c0_24] : memref<16x1xf32, #tpu.memory_space<vmem>>, vector<16x1xf32>
    %42 = vector.extract_strided_slice %41 {offsets = [0, 0], sizes = [12, 1], strides = [1, 1]} : vector<16x1xf32> to vector<12x1xf32>
    %43 = vector.broadcast %42 : vector<12x1xf32> to vector<12x64xf32>
    %44 = arith.addf %40, %43 : vector<12x64xf32>
    %cst_25 = arith.constant 0.000000e+00 : f32
    %45 = vector.broadcast %cst_25 : f32 to vector<12x64xf32>
    %46 = arith.maximumf %44, %45 : vector<12x64xf32>
    %c0_26 = arith.constant 0 : index
    %c0_27 = arith.constant 0 : index
    %c0_28 = arith.constant 0 : index
    %47 = vector.load %arg9[%c0_26, %c0_27, %c0_28] : memref<1x16x64xf32, #tpu.memory_space<vmem>>, vector<1x12x64xf32>
    %48 = vector.shape_cast %47 : vector<1x12x64xf32> to vector<12x64xf32>
    %49 = vector.shape_cast %46 : vector<12x64xf32> to vector<1x12x64xf32>
    tpu.vector_store %arg9[%c0_26, %c0_27, %c0_28], %49 {strides = array<i32>} : memref<1x16x64xf32, #tpu.memory_space<vmem>>, vector<1x12x64xf32>,
    %50 = arith.extf %10 : vector<4x64xbf16> to vector<4x64xf32>
    %c0_29 = arith.constant 0 : index
    %c0_30 = arith.constant 0 : index
    %51 = vector.load %arg7[%c0_29, %c0_30] : memref<4x1xf32, #tpu.memory_space<vmem>>, vector<4x1xf32>
    %52 = vector.broadcast %51 : vector<4x1xf32> to vector<4x64xf32>
    %53 = arith.mulf %50, %52 : vector<4x64xf32>
    %54 = vector.extract_strided_slice %41 {offsets = [12, 0], sizes = [4, 1], strides = [1, 1]} : vector<16x1xf32> to vector<4x1xf32>
    %55 = vector.broadcast %54 : vector<4x1xf32> to vector<4x64xf32>
    %56 = arith.addf %53, %55 : vector<4x64xf32>
    %cst_31 = arith.constant 0.000000e+00 : f32
    %57 = vector.broadcast %cst_31 : f32 to vector<4x64xf32>
    %58 = arith.maximumf %56, %57 : vector<4x64xf32>
    %c0_32 = arith.constant 0 : index
    %c12_33 = arith.constant 12 : index
    %c0_34 = arith.constant 0 : index
    %59 = vector.load %arg9[%c0_32, %c12_33, %c0_34] : memref<1x16x64xf32, #tpu.memory_space<vmem>>, vector<1x4x64xf32>
    %60 = vector.shape_cast %59 : vector<1x4x64xf32> to vector<4x64xf32>
    %61 = vector.shape_cast %58 : vector<4x64xf32> to vector<1x4x64xf32>
    tpu.vector_store %arg9[%c0_32, %c12_33, %c0_34], %61 {strides = array<i32>} : memref<1x16x64xf32, #tpu.memory_space<vmem>>, vector<1x4x64xf32>,
    return
  }
  func.func @transform_0(%arg0: i32, %arg1: i32) -> (i32, i32, i32) {
    %c0_i32 = arith.constant 0 : i32
    %c0_i32_0 = arith.constant 0 : i32
    return %arg0, %c0_i32, %arg1 : i32, i32, i32
  }
  func.func @transform_1(%arg0: i32, %arg1: i32) -> (i32, i32, i32, i32) {
    %c0_i32 = arith.constant 0 : i32
    %c0_i32_0 = arith.constant 0 : i32
    %c0_i32_1 = arith.constant 0 : i32
    return %arg0, %arg1, %c0_i32, %c0_i32_0 : i32, i32, i32, i32
  }
  func.func @transform_2(%arg0: i32, %arg1: i32) -> (i32, i32) {
    %c0_i32 = arith.constant 0 : i32
    %c0_i32_0 = arith.constant 0 : i32
    %c0_i32_1 = arith.constant 0 : i32
    return %c0_i32, %c0_i32_0 : i32, i32
  }
  func.func @transform_3(%arg0: i32, %arg1: i32) -> (i32, i32) {
    %c0_i32 = arith.constant 0 : i32
    %c0_i32_0 = arith.constant 0 : i32
    %c0_i32_1 = arith.constant 0 : i32
    return %c0_i32, %c0_i32_0 : i32, i32
  }
  func.func @transform_4(%arg0: i32, %arg1: i32) -> (i32, i32) {
    %c0_i32 = arith.constant 0 : i32
    %c0_i32_0 = arith.constant 0 : i32
    %c0_i32_1 = arith.constant 0 : i32
    return %c0_i32, %c0_i32_0 : i32, i32
  }
  func.func @transform_5(%arg0: i32, %arg1: i32) -> (i32, i32) {
    %c0_i32 = arith.constant 0 : i32
    %c0_i32_0 = arith.constant 0 : i32
    %c0_i32_1 = arith.constant 0 : i32
    return %c0_i32, %c0_i32_0 : i32, i32
  }
  func.func @transform_6(%arg0: i32, %arg1: i32) -> (i32, i32) {
    %c0_i32 = arith.constant 0 : i32
    %c0_i32_0 = arith.constant 0 : i32
    %c0_i32_1 = arith.constant 0 : i32
    return %c0_i32, %c0_i32_0 : i32, i32
  }
  func.func @transform_7(%arg0: i32, %arg1: i32) -> (i32, i32, i32) {
    %c0_i32 = arith.constant 0 : i32
    %c0_i32_0 = arith.constant 0 : i32
    return %arg0, %c0_i32, %arg1 : i32, i32, i32
  }
}

</mosaic_0001>

<llo_original>
// kernel: tpu_custom_call.1
$region0: #{tpu_custom_call.1}
  #allocation0 [shape = 'u32[]', space=smem, size = 0x4, offset = 0x4, fixed_abs, tag = 'smem constant byte address 0x4 - core index']
  #allocation1 [shape = 'u32[72,128]{1,0:T(1,128)}', space=vmem, size = 0x9000, scoped, tag = 'internal scratch']
  %s0 = inlined_call_operand.vmem [shape: bf16[2,16,64], index: 0, kind: input, shape index: {}]
  %s1 = inlined_call_operand.hbm [shape: bf16[2,1,8,8], index: 1, kind: input, shape index: {}]
  %s2 = inlined_call_operand.vmem [shape: bf16[1,64], index: 2, kind: input, shape index: {}]
  %s3 = inlined_call_operand.hbm [shape: bf16[12,20], index: 3, kind: input, shape index: {}]
  %s4 = inlined_call_operand.hbm [shape: bf16[12,16], index: 4, kind: input, shape index: {}]
  %s5 = inlined_call_operand.vmem [shape: f32[4,1], index: 5, kind: input, shape index: {}]
  %s6 = inlined_call_operand.vmem [shape: f32[16,1], index: 6, kind: input, shape index: {}]
  %s7 = inlined_call_operand.hbm [shape: f32[2,16,64], index: 7, kind: output, shape index: {}]
  %s8 = sld [smem:[#allocation0]]
  $region73: #{tpu_custom_call.1} parent=0
    _
  %s10 = ssub.s32 1, %s8
  %s11 = scalar_select 0, %s10, %s8
  $region1: #{tpu_custom_call.1} parent=0
    #allocation2 [shape = 'u8[4096]{0}', space=vmem, size = 0x1000, scoped, tag = 'input window, operand 1']
    #allocation3 [shape = 's32[2]{0}', space=sflag, size = 0x8, scoped, tag = 'scoped memory for tpu_custom_call.1']
    #allocation4 [shape = 's32[2]{0}', space=sflag, size = 0x8, scoped, tag = 'scoped memory for tpu_custom_call.1']
    #allocation5 [shape = 'u8[4096]{0}', space=vmem, size = 0x1000, scoped, tag = 'input window, operand 3, single buffered']
    #allocation6 [shape = 's32[1]{0}', space=sflag, size = 0x4, scoped, tag = 'scoped memory for tpu_custom_call.1']
    #allocation7 [shape = 'u8[4096]{0}', space=vmem, size = 0x1000, scoped, tag = 'input window, operand 4, single buffered']
    #allocation8 [shape = 'u8[16384]{0}', space=vmem, size = 0x4000, scoped, tag = 'output window, operand 0']
    %12 = vsyncpa [#allocation3], 0
    %s13 = scalar_lea.sflag [#allocation3], 1
    %14 = vsyncpa %s13, 0
    %15 = vsyncpa [#allocation6], 0
    %16 = vsyncpa [#allocation4], 0
    %s17 = scalar_lea.sflag [#allocation4], 1
    %18 = vsyncpa %s17, 0
    loop: start=0, step=1, limit=4
    $region2: #{tpu_custom_call.1} parent=1 // loop_pre_header
      _
    $region3: #{tpu_custom_call.1} parent=1 // loop_header
      %s20 = sphi 0, %s24
      %p21 = scmp.ge.s32.totalorder %s20, 4
      %s27 = sphi 0, %s39
      %s28 = sphi 0, %s35
      %s29 = sphi 0, %s27
      %s30 = sphi 0, %s28
      %s31 = sphi 0, %s29
      %s32 = sphi 0, %s30
      %s44 = sphi 0, %s46
      %s47 = sphi 0, %s44
      %s48 = sphi 0, %s47
      %s64 = sphi 0, %s48
      %s72 = sphi 0, %s74
      %s75 = sphi 0, %s72
      %s76 = sphi 0, %s75
      %s92 = sphi 0, %s76
      %s96 = sphi 0, %s96
      %s98 = sphi 0, %s96
      %s99 = sphi 0, %s98
      %s113 = sphi 0, %s99
      %s117 = sphi 0, %s117
      %s119 = sphi 0, %s117
      %s120 = sphi 0, %s119
      %s134 = sphi 0, %s120
      %s138 = sphi 0, %s138
      %s140 = sphi 0, %s138
      %s141 = sphi 0, %s140
      %s155 = sphi 0, %s141
      %s159 = sphi 0, %s159
      %s161 = sphi 0, %s159
      %s162 = sphi 0, %s161
      %s176 = sphi 0, %s162
      %s180 = sphi 0, %s180
      %s182 = sphi 0, %s180
      %s183 = sphi 0, %s182
      %s197 = sphi 0, %s183
      %s205 = sphi 0, %s207
      %s208 = sphi 0, %s205
      %s209 = sphi 0, %s208
      %s225 = sphi 0, %s209
    $region4: #{tpu_custom_call.1} parent=1 // loop_header_branch
      %23 = sbr.rel (%p21) target = $region8
    $region5: #{tpu_custom_call.1} parent=1 // loop_body
      %s25 = ssub.s32 %s20, 1
      %s26 = ssub.s32 %s20, 2
      %s33 = sadd.s32 1, %s28
      %p34 = scmp.ge.s32.totalorder %s33, 1
      %s35 = scalar_select %p34, 0, %s33
      %s36 = sadd.s32 1, %s27
      %s37 = scalar_select %p34, %s36, %s27
      %p38 = scmp.ge.s32.totalorder %s37, 2
      %s39 = scalar_select %p38, 0, %s37
      %s40 = ssub.s32 %s27, %s39
      %s41 = ssub.s32 %s28, %s35
      %s42 = sor.u32 %s40, %s41
      %p43 = scmp.eq.s32.totalorder %s42, 0
      %s45 = sadd.s32 %s44, 1
      %s46 = scalar_select %p43, %s44, %s45
      %p49 = pneg %p43
      %p50 = scmp.eq.s32.totalorder %s20, 1
      %p51 = por %p49, %p50
      %p52 = scmp.ne.s32.totalorder %s44, %s47
      %p53 = scmp.eq.s32.totalorder %s20, 0
      %p54 = por %p52, %p53
      %p55 = scmp.ne.s32.totalorder %s44, %s47
      %p56 = scmp.eq.s32.totalorder %s25, 1
      %p57 = por %p55, %p56
      %p58 = scmp.ne.s32.totalorder %s47, %s48
      %p59 = scmp.eq.s32.totalorder %s25, 0
      %p60 = por %p58, %p59
      %p61 = scmp.ne.s32.totalorder %s47, %s48
      %p62 = scmp.eq.s32.totalorder %s26, 1
      %p63 = por %p61, %p62
      %p65 = scmp.ne.s32.totalorder %s48, %s64
      %p66 = scmp.eq.s32.totalorder %s26, 0
      %p67 = por %p65, %p66
      %s68 = ssub.s32 %s27, %s39
      %s69 = ssub.s32 %s28, %s35
      %s70 = sor.u32 %s68, %s69
      %p71 = scmp.eq.s32.totalorder %s70, 0
      %s73 = sadd.s32 %s72, 1
      %s74 = scalar_select %p71, %s72, %s73
      %p77 = pneg %p71
      %p78 = scmp.eq.s32.totalorder %s20, 1
      %p79 = por %p77, %p78
      %p80 = scmp.ne.s32.totalorder %s72, %s75
      %p81 = scmp.eq.s32.totalorder %s20, 0
      %p82 = por %p80, %p81
      %p83 = scmp.ne.s32.totalorder %s72, %s75
      %p84 = scmp.eq.s32.totalorder %s25, 1
      %p85 = por %p83, %p84
      %p86 = scmp.ne.s32.totalorder %s75, %s76
      %p87 = scmp.eq.s32.totalorder %s25, 0
      %p88 = por %p86, %p87
      %p89 = scmp.ne.s32.totalorder %s75, %s76
      %p90 = scmp.eq.s32.totalorder %s26, 1
      %p91 = por %p89, %p90
      %p93 = scmp.ne.s32.totalorder %s76, %s92
      %p94 = scmp.eq.s32.totalorder %s26, 0
      %p95 = por %p93, %p94
      %s97 = sadd.s32 %s96, 1
      %p100 = scmp.eq.s32.totalorder %s20, 1
      %p101 = scmp.ne.s32.totalorder %s96, %s98
      %p102 = scmp.eq.s32.totalorder %s20, 0
      %p103 = por %p101, %p102
      %p104 = scmp.ne.s32.totalorder %s96, %s98
      %p105 = scmp.eq.s32.totalorder %s25, 1
      %p106 = por %p104, %p105
      %p107 = scmp.ne.s32.totalorder %s98, %s99
      %p108 = scmp.eq.s32.totalorder %s25, 0
      %p109 = por %p107, %p108
      %p110 = scmp.ne.s32.totalorder %s98, %s99
      %p111 = scmp.eq.s32.totalorder %s26, 1
      %p112 = por %p110, %p111
      %p114 = scmp.ne.s32.totalorder %s99, %s113
      %p115 = scmp.eq.s32.totalorder %s26, 0
      %p116 = por %p114, %p115
      %s118 = sadd.s32 %s117, 1
      %p121 = scmp.eq.s32.totalorder %s20, 1
      %p122 = scmp.ne.s32.totalorder %s117, %s119
      %p123 = scmp.eq.s32.totalorder %s20, 0
      %p124 = por %p122, %p123
      %p125 = scmp.ne.s32.totalorder %s117, %s119
      %p126 = scmp.eq.s32.totalorder %s25, 1
      %p127 = por %p125, %p126
      %p128 = scmp.ne.s32.totalorder %s119, %s120
      %p129 = scmp.eq.s32.totalorder %s25, 0
      %p130 = por %p128, %p129
      %p131 = scmp.ne.s32.totalorder %s119, %s120
      %p132 = scmp.eq.s32.totalorder %s26, 1
      %p133 = por %p131, %p132
      %p135 = scmp.ne.s32.totalorder %s120, %s134
      %p136 = scmp.eq.s32.totalorder %s26, 0
      %p137 = por %p135, %p136
      %s139 = sadd.s32 %s138, 1
      %p142 = scmp.eq.s32.totalorder %s20, 1
      %p143 = scmp.ne.s32.totalorder %s138, %s140
      %p144 = scmp.eq.s32.totalorder %s20, 0
      %p145 = por %p143, %p144
      %p146 = scmp.ne.s32.totalorder %s138, %s140
      %p147 = scmp.eq.s32.totalorder %s25, 1
      %p148 = por %p146, %p147
      %p149 = scmp.ne.s32.totalorder %s140, %s141
      %p150 = scmp.eq.s32.totalorder %s25, 0
      %p151 = por %p149, %p150
      %p152 = scmp.ne.s32.totalorder %s140, %s141
      %p153 = scmp.eq.s32.totalorder %s26, 1
      %p154 = por %p152, %p153
      %p156 = scmp.ne.s32.totalorder %s141, %s155
      %p157 = scmp.eq.s32.totalorder %s26, 0
      %p158 = por %p156, %p157
      %s160 = sadd.s32 %s159, 1
      %p163 = scmp.eq.s32.totalorder %s20, 1
      %p164 = scmp.ne.s32.totalorder %s159, %s161
      %p165 = scmp.eq.s32.totalorder %s20, 0
      %p166 = por %p164, %p165
      %p167 = scmp.ne.s32.totalorder %s159, %s161
      %p168 = scmp.eq.s32.totalorder %s25, 1
      %p169 = por %p167, %p168
      %p170 = scmp.ne.s32.totalorder %s161, %s162
      %p171 = scmp.eq.s32.totalorder %s25, 0
      %p172 = por %p170, %p171
      %p173 = scmp.ne.s32.totalorder %s161, %s162
      %p174 = scmp.eq.s32.totalorder %s26, 1
      %p175 = por %p173, %p174
      %p177 = scmp.ne.s32.totalorder %s162, %s176
      %p178 = scmp.eq.s32.totalorder %s26, 0
      %p179 = por %p177, %p178
      %s181 = sadd.s32 %s180, 1
      %p184 = scmp.eq.s32.totalorder %s20, 1
      %p185 = scmp.ne.s32.totalorder %s180, %s182
      %p186 = scmp.eq.s32.totalorder %s20, 0
      %p187 = por %p185, %p186
      %p188 = scmp.ne.s32.totalorder %s180, %s182
      %p189 = scmp.eq.s32.totalorder %s25, 1
      %p190 = por %p188, %p189
      %p191 = scmp.ne.s32.totalorder %s182, %s183
      %p192 = scmp.eq.s32.totalorder %s25, 0
      %p193 = por %p191, %p192
      %p194 = scmp.ne.s32.totalorder %s182, %s183
      %p195 = scmp.eq.s32.totalorder %s26, 1
      %p196 = por %p194, %p195
      %p198 = scmp.ne.s32.totalorder %s183, %s197
      %p199 = scmp.eq.s32.totalorder %s26, 0
      %p200 = por %p198, %p199
      %s201 = ssub.s32 %s27, %s39
      %s202 = ssub.s32 %s28, %s35
      %s203 = sor.u32 %s201, %s202
      %p204 = scmp.eq.s32.totalorder %s203, 0
      %s206 = sadd.s32 %s205, 1
      %s207 = scalar_select %p204, %s205, %s206
      %p210 = pneg %p204
      %p211 = scmp.eq.s32.totalorder %s20, 1
      %p212 = por %p210, %p211
      %p213 = scmp.ne.s32.totalorder %s205, %s208
      %p214 = scmp.eq.s32.totalorder %s20, 0
      %p215 = por %p213, %p214
      %p216 = scmp.ne.s32.totalorder %s205, %s208
      %p217 = scmp.eq.s32.totalorder %s25, 1
      %p218 = por %p216, %p217
      %p219 = scmp.ne.s32.totalorder %s208, %s209
      %p220 = scmp.eq.s32.totalorder %s25, 0
      %p221 = por %p219, %p220
      %p222 = scmp.ne.s32.totalorder %s208, %s209
      %p223 = scmp.eq.s32.totalorder %s26, 1
      %p224 = por %p222, %p223
      %p226 = scmp.ne.s32.totalorder %s209, %s225
      %p227 = scmp.eq.s32.totalorder %s26, 0
      %p228 = por %p226, %p227
      %p229 = scmp.le.s32.totalorder 1, %s20
      %p230 = scmp.lt.s32.totalorder %s20, 3
      %p231 = pnand %p229, %p230
      %p232 = pneg %p231
      // Predicated region
      $region9: #{tpu_custom_call.1} parent=5 // pred_check
        _
      $region10: #{tpu_custom_call.1} parent=5 // pred_check_branch
        %234 = sbr.rel (%p231) target = $region12
      $region11: #{tpu_custom_call.1} parent=5 // pred_region
        %s235 = ssub.s32 %s20, 1
        // Predicated region
        $region13: #{tpu_custom_call.1} parent=11 // pred_check
          %p236 = pneg %p109
        $region14: #{tpu_custom_call.1} parent=11 // pred_check_branch
          %238 = sbr.rel (%p236) target = $region16
        $region15: #{tpu_custom_call.1} parent=11 // pred_region
          _
        $region16: #{tpu_custom_call.1} parent=11 // pred_fallthru
          _
        // Predicated region
        $region17: #{tpu_custom_call.1} parent=11 // pred_check
          %p239 = pneg %p130
        $region18: #{tpu_custom_call.1} parent=11 // pred_check_branch
          %241 = sbr.rel (%p239) target = $region20
        $region19: #{tpu_custom_call.1} parent=11 // pred_region
          %243 = vsyncadd [#allocation6], 0
          %s244 = sshll.u32 %s3, 4
          %s245 = int_to_ptr.hbm [resolvable:$true] %s244
          %s246 = sshll.u32 [#allocation5], 4
          %s247 = int_to_ptr.vmem [resolvable:$true] %s246
          %252 = dma.hbm_to_vmem [thread:$0]  %s245, 128, %s247, [#allocation6], 64, 64, 4
        $region20: #{tpu_custom_call.1} parent=11 // pred_fallthru
          _
        // Predicated region
        $region21: #{tpu_custom_call.1} parent=11 // pred_check
          %p253 = pneg %p151
        $region22: #{tpu_custom_call.1} parent=11 // pred_check_branch
          %255 = sbr.rel (%p253) target = $region24
        $region23: #{tpu_custom_call.1} parent=11 // pred_region
          %257 = vsyncadd [#allocation6], 0
          %s258 = sshll.u32 %s4, 4
          %s259 = int_to_ptr.hbm [resolvable:$true] %s258
          %s260 = sshll.u32 [#allocation7], 4
          %s261 = int_to_ptr.vmem [resolvable:$true] %s260
          %266 = dma.hbm_to_vmem [thread:$0]  %s259, 128, %s261, [#allocation6], 64, 64, 4
        $region24: #{tpu_custom_call.1} parent=11 // pred_fallthru
          _
        // Predicated region
        $region25: #{tpu_custom_call.1} parent=11 // pred_check
          %p267 = pneg %p172
        $region26: #{tpu_custom_call.1} parent=11 // pred_check_branch
          %269 = sbr.rel (%p267) target = $region28
        $region27: #{tpu_custom_call.1} parent=11 // pred_region
          _
        $region28: #{tpu_custom_call.1} parent=11 // pred_fallthru
          _
        // Predicated region
        $region29: #{tpu_custom_call.1} parent=11 // pred_check
          %p270 = pneg %p193
        $region30: #{tpu_custom_call.1} parent=11 // pred_check_branch
          %272 = sbr.rel (%p270) target = $region32
        $region31: #{tpu_custom_call.1} parent=11 // pred_region
          _
        $region32: #{tpu_custom_call.1} parent=11 // pred_fallthru
          _
      $region12: #{tpu_custom_call.1} parent=5 // pred_fallthru
        _
      %p273 = scmp.lt.s32.totalorder %s20, 2
      // Predicated region
      $region33: #{tpu_custom_call.1} parent=5 // pred_check
        %p274 = pneg %p273
      $region34: #{tpu_custom_call.1} parent=5 // pred_check_branch
        %276 = sbr.rel (%p274) target = $region36
      $region35: #{tpu_custom_call.1} parent=5 // pred_region
        // Predicated region
        $region37: #{tpu_custom_call.1} parent=35 // pred_check
          %p277 = pneg %p54
        $region38: #{tpu_custom_call.1} parent=35 // pred_check_branch
          %279 = sbr.rel (%p277) target = $region40
        $region39: #{tpu_custom_call.1} parent=35 // pred_region
          %p280 = scmp.lt.s32.totalorder %s27, 1
          %s281 = scalar_select %p280, %s27, 1
          %p282 = scmp.lt.s32.totalorder %s28, 0
          %s283 = scalar_select %p282, %s28, 0
          %s284 = smul.addr %s281, 2
          %s285 = sadd.s32 %s283, %s284
          %s286 = smul.addr %s285, 4
          %s287 = scalar_lea.vmem %s0, %s286
        $region40: #{tpu_custom_call.1} parent=35 // pred_fallthru
          _
        // Predicated region
        $region41: #{tpu_custom_call.1} parent=35 // pred_check
          %p288 = pneg %p82
        $region42: #{tpu_custom_call.1} parent=35 // pred_check_branch
          %290 = sbr.rel (%p288) target = $region44
        $region43: #{tpu_custom_call.1} parent=35 // pred_region
          %s291 = sand.u32 %s72, 1
          %s292 = scalar_lea.sflag [#allocation3], %s291
          %s293 = sand.u32 %s72, 1
          %s294 = smul.addr %s293, 4
          %s295 = scalar_lea.vmem [#allocation2], %s294
          %297 = vsyncadd %s292, 0
          %s298 = sadd.s32 %s28, %s27
          %s299 = smul.addr %s298, 4
          %s300 = scalar_lea.hbm %s1, %s299
          %s302 = sshll.u32 %s300, 4
          %s303 = int_to_ptr.hbm [resolvable:$true] %s302
          %s304 = sshll.u32 %s295, 4
          %s305 = int_to_ptr.vmem [resolvable:$true] %s304
          %307 = dma.hbm_to_vmem [thread:$0]  %s303, 64, %s305, %s292
        $region44: #{tpu_custom_call.1} parent=35 // pred_fallthru
          _
      $region36: #{tpu_custom_call.1} parent=5 // pred_fallthru
        _
      %p308 = scmp.le.s32.totalorder 1, %s20
      %p309 = scmp.lt.s32.totalorder %s20, 3
      %p310 = pnand %p308, %p309
      %p311 = pneg %p310
      // Predicated region
      $region45: #{tpu_custom_call.1} parent=5 // pred_check
        _
      $region46: #{tpu_custom_call.1} parent=5 // pred_check_branch
        %313 = sbr.rel (%p310) target = $region48
      $region47: #{tpu_custom_call.1} parent=5 // pred_region
        %s314 = ssub.s32 %s20, 1
        %s315 = sand.u32 %s75, 1
        %s316 = scalar_lea.sflag [#allocation3], %s315
        %s317 = sand.u32 %s75, 1
        %s318 = smul.addr %s317, 4
        %s319 = scalar_lea.vmem [#allocation2], %s318
        // Predicated region
        $region49: #{tpu_custom_call.1} parent=47 // pred_check
          %p320 = pneg %p88
        $region50: #{tpu_custom_call.1} parent=47 // pred_check_branch
          %322 = sbr.rel (%p320) target = $region52
        $region51: #{tpu_custom_call.1} parent=47 // pred_region
          %324 = dma.done %s316, 64
        $region52: #{tpu_custom_call.1} parent=47 // pred_fallthru
          _
        // Predicated region
        $region53: #{tpu_custom_call.1} parent=47 // pred_check
          %p325 = pneg %p130
        $region54: #{tpu_custom_call.1} parent=47 // pred_check_branch
          %327 = sbr.rel (%p325) target = $region56
        $region55: #{tpu_custom_call.1} parent=47 // pred_region
          %329 = dma.done [#allocation6], 128
        $region56: #{tpu_custom_call.1} parent=47 // pred_fallthru
          _
        // Predicated region
        $region57: #{tpu_custom_call.1} parent=47 // pred_check
          %p330 = pneg %p151
        $region58: #{tpu_custom_call.1} parent=47 // pred_check_branch
          %332 = sbr.rel (%p330) target = $region60
        $region59: #{tpu_custom_call.1} parent=47 // pred_region
          %334 = dma.done [#allocation6], 128
        $region60: #{tpu_custom_call.1} parent=47 // pred_fallthru
          _
        %p335 = scmp.lt.s32.totalorder %s29, 1
        %s336 = scalar_select %p335, %s29, 1
        %p337 = scmp.lt.s32.totalorder %s30, 0
        %s338 = scalar_select %p337, %s30, 0
        %s339 = smul.addr %s336, 2
        %s340 = sadd.s32 %s338, %s339
        %s341 = smul.addr %s340, 4
        %s342 = scalar_lea.vmem %s0, %s341
        %p343 = pneg %p60
        %p344 = pneg %p57
        %s345 = sand.u32 %s75, 1
        %s346 = scalar_lea.sflag [#allocation3], %s345
        %s347 = sand.u32 %s75, 1
        %s348 = smul.addr %s347, 4
        %s349 = scalar_lea.vmem [#allocation2], %s348
        %p350 = pneg %p88
        %p351 = pneg %p85
        %p352 = pneg %p109
        %p353 = pneg %p106
        %p354 = pneg %p130
        %p355 = pneg %p127
        %p356 = pneg %p151
        %p357 = pneg %p148
        %p358 = pneg %p172
        %p359 = pneg %p169
        %p360 = pneg %p193
        %p361 = pneg %p190
        %p362 = pneg %p221
        %p363 = pneg %p218
        %s364 = sand.u32 %s208, 1
        %s365 = scalar_lea.sflag [#allocation4], %s364
        %s366 = sand.u32 %s208, 1
        %s367 = smul.addr %s366, 16
        %s368 = scalar_lea.vmem [#allocation8], %s367
        %p369 = scmp.lt.s32.totalorder %s29, 1
        %s370 = scalar_select %p369, %s29, 1
        %p371 = scmp.lt.s32.totalorder %s30, 0
        %s372 = scalar_select %p371, %s30, 0
        %s373 = smul.addr %s370, 2
        %s374 = sadd.s32 %s372, %s373
        %s375 = smul.addr %s374, 4
        %s376 = scalar_lea.vmem %s0, %s375
        %v378 = vld [vmem:[%s376] sm:$0x3]
        %v379 = vld [vmem:[%s376] sm:$0xc]
        %v380 = vld [vmem:[%s376 + $0x4] sm:$0x3]
        %v381 = vld [vmem:[%s376 + $0x4] sm:$0xc]
        %v382 = vunpack.c.l.bf16 %v378
        %v383 = vunpack.c.l.bf16 %v379
        %v385 = vrot.slane %v383, 4
        %v387 = vmax.f32 %v382, %v385
        %v388 = vpack.c.bf16 %v387, %v387
        %v389 = vunpack.c.l.bf16 %v380
        %v390 = vunpack.c.l.bf16 %v381
        %v392 = vrot.slane %v390, 4
        %v394 = vmax.f32 %v389, %v392
        %v395 = vpack.c.bf16 %v394, %v394
        %v396 = vunpack.c.l.bf16 %v388
        %v397 = vunpack.c.l.bf16 %v395
        %v398 = vmax.f32 %v396, %v397
        %v399 = vpack.c.bf16 %v398, %v398
        %v400 = vld [vmem:[%s319] sm:$0xf]
        %v401 = vld [vmem:[%s2] sm:$0x1]
        %v403 = vunpack.c.l.b16 %v380
        %v404 = vpack.c.b16 %v403, %v403
        %405 = vrot.lane.b32.xlu0 %v404, 8
        %v406 = vpop.permute.xlu0 %405
        %vm407 = vcmask 64512
        %v410 = vsel %vm407, %v400, %v406
        %v412 = vunpack.c.l.b16 %v381
        %v413 = vpack.c.b16 %v412, %v412
        %414 = vrot.lane.b32.xlu0 %v413, 8
        %v415 = vpop.permute.xlu0 %414
        %v417 = vsel %vm407, %v400, %v415
        %v419 = vrot.slane %v417, 2
        %420 = vrot.lane.b32.xlu0 %v419, 1
        %v421 = vpop.permute.xlu0 %420
        %vm422 = vcmask 7168
        %v425 = vsel %vm422, 0, %v421
        %v428 = vpack.i.b16 %v401, %v401
        %v430 = vperm.slane %v428, 0
        %v431 = vunpack.c.l.bf16 %v425
        %v432 = vunpack.c.l.bf16 %v430
        %v433 = vmul.f32 %v431, %v432
        %v434 = vpack.c.bf16 %v433, %v433
        %v436 = vunpack.c.l.b16 %v379
        %v437 = vpack.c.b16 %v436, %v436
        %v438 = vrot.slane %v437, 2
        %439 = vrot.lane.b32.xlu0 %v438, 1
        %v440 = vpop.permute.xlu0 %439
        %v442 = vsel %vm422, 0, %v440
        %v444 = vunpack.c.l.bf16 %v442
        %v445 = vmul.f32 %v444, %v432
        %v446 = vpack.c.bf16 %v445, %v445
        %v447 = vrot.slane %v413, 2
        %448 = vrot.lane.b32.xlu0 %v447, 1
        %v449 = vpop.permute.xlu0 %448
        %v451 = vsel %vm422, 0, %v449
        %v453 = vunpack.c.l.bf16 %v451
        %v454 = vmul.f32 %v453, %v432
        %v455 = vpack.c.bf16 %v454, %v454
        %v457 = vrot.slane %v410, 6
        %v458 = vrot.slane %v417, 6
        %v460 = vunpack.c.l.b16 %v446
        %v461 = vpack.c.b16 %v460, %v460
        %v462 = vrot.slane %v461, 2
        %vm463 = vcmask 1041408
        %v466 = vsel %vm463, %v434, %v457
        %vm467 = vcmask 1043456
        %v469 = vsel %vm467, %v466, %v458
        %vm470 = vcmask 1045504
        %v472 = vsel %vm470, %v469, %v462
        %v474 = vld [vmem:[#allocation5] sm:$0xf]
        %v475 = vld [vmem:[#allocation5 + $0x4] sm:$0x3]
        %v476 = vld [vmem:[#allocation7] sm:$0xf]
        %v477 = vld [vmem:[#allocation7 + $0x4] sm:$0x3]
        %v478 = vld [vmem:[%s376] sm:$0xf]
        %v479 = vld [vmem:[%s376 + $0x4] sm:$0xf]
        %v482 = vunpack.c.l.b16 %v476
        %v483 = vunpack.c.l.b16 %v477
        %v484 = vpack.c.b16 %v483, %v482
        %v487 = vunpack.c.l.b16 %v478
        %v488 = vunpack.c.l.b16 %v479
        %v489 = vpack.c.b16 %v488, %v487
        %vm491 = vcmask 130048
        %v493 = vsel %vm491, %v484, 0
        %495 = vmatpush.bf16.msra.mxu0 0
        %496 = vmatpush.bf16.msra.mxu0 0
        %497 = vmatpush.bf16.msra.mxu0 0
        %498 = vmatpush.bf16.msra.mxu0 0
        %499 = vmatpush.bf16.msra.mxu0 0
        %500 = vmatpush.bf16.msra.mxu0 0
        %501 = vmatpush.bf16.msra.mxu0 0
        %502 = vmatpush.bf16.msra.mxu0 %v489
        %503 = vmatmul.bf16.gmra.mxu0 %v493
        %v504 = vpop.f32.mrf.mxu0
        %v505 = vadd.f32 0.0, %v504
        %v506 = vpop.f32.mrf.mxu0
        %v507 = vadd.f32 0.0, %v506
        %508 = vdwg.mxu0
        %v511 = vunpack.c.l.b16 %v474
        %v512 = vunpack.c.l.b16 %v475
        %v513 = vpack.c.b16 %v512, %v511
        %vm514 = vcmask 162816
        %v516 = vsel %vm514, %v513, 0
        %v519 = vsel %vm463, %v455, 0
        %521 = vmatpush.bf16.msra.mxu0 0
        %522 = vmatpush.bf16.msra.mxu0 0
        %523 = vmatpush.bf16.msra.mxu0 0
        %524 = vmatpush.bf16.msra.mxu0 0
        %525 = vmatpush.bf16.msra.mxu0 0
        %526 = vmatpush.bf16.msra.mxu0 0
        %527 = vmatpush.bf16.msra.mxu0 %v519
        %528 = vmatpush.bf16.msra.mxu0 %v472
        %529 = vmatmul.bf16.gmra.mxu0 %v516
        %v530 = vpop.f32.mrf.mxu0
        %v531 = vadd.f32 %v505, %v530
        %v532 = vpop.f32.mrf.mxu0
        %v533 = vadd.f32 %v507, %v532
        %534 = vdwg.mxu0
        %v535 = vld [vmem:[%s6] sm:$0xff]
        %v536 = vld [vmem:[%s6 + $0x8] sm:$0xff]
        %538 = vset.pattern.permute.xlu0 0
        %539 = vperm.xlu0 %538, %v535
        %v540 = vpop.permute.xlu0 %539
        %543 = vset.pattern.permute.xlu0 0
        %544 = vperm.xlu0 %543, %v536
        %v545 = vpop.permute.xlu0 %544
        %v547 = vadd.f32 %v531, %v540
        %v548 = vadd.f32 %v533, %v545
        %v549 = vmax.f32 %v547, 0.0
        %v550 = vmax.f32 %v548, 0.0
        %vm551 = vcmask 523264
        %552 = vst.msk [vmem:[%s368] sm:$0xff] %vm551, %v549
        %vm553 = vcmask 519168
        %554 = vst.msk [vmem:[%s368 + $0x8] sm:$0xf] %vm553, %v550
        %v555 = vunpack.c.l.bf16 %v399
        %v556 = vld [vmem:[%s5] sm:$0xf]
        %558 = vset.pattern.permute.xlu0 0
        %559 = vperm.xlu0 %558, %v556
        %v560 = vpop.permute.xlu0 %559
        %v562 = vmul.f32 %v555, %v560
        %v563 = vrot.slane %v545, 4
        %v565 = vadd.f32 %v562, %v563
        %v566 = vmax.f32 %v565, 0.0
        %567 = vst.msk [vmem:[%s368 + $0xc] sm:$0xf] %vm553, %v566
        %s568 = sand.u32 %s208, 1
        %s569 = scalar_lea.sflag [#allocation4], %s568
        %s570 = sand.u32 %s208, 1
        %s571 = smul.addr %s570, 16
        %s572 = scalar_lea.vmem [#allocation8], %s571
        // Predicated region
        $region61: #{tpu_custom_call.1} parent=47 // pred_check
          %p573 = pneg %p218
        $region62: #{tpu_custom_call.1} parent=47 // pred_check_branch
          %575 = sbr.rel (%p573) target = $region64
        $region63: #{tpu_custom_call.1} parent=47 // pred_region
          %577 = vsyncadd %s569, 0
          %s578 = smul.addr %s29, 2
          %s579 = sadd.s32 %s30, %s578
          %s580 = smul.addr %s579, 8
          %s581 = scalar_lea.hbm %s7, %s580
          %s582 = sshll.u32 %s572, 4
          %s583 = int_to_ptr.vmem [resolvable:$true] %s582
          %s584 = sshll.u32 %s581, 4
          %s585 = int_to_ptr.hbm [resolvable:$true] %s584
          %590 = dma.vmem_to_hbm [thread:$0]  %s583, 256, %s585, %s569, 128, 128, 8
        $region64: #{tpu_custom_call.1} parent=47 // pred_fallthru
          _
      $region48: #{tpu_custom_call.1} parent=5 // pred_fallthru
        _
      %p591 = scmp.le.s32.totalorder 2, %s20
      // Predicated region
      $region65: #{tpu_custom_call.1} parent=5 // pred_check
        %p592 = pneg %p591
      $region66: #{tpu_custom_call.1} parent=5 // pred_check_branch
        %594 = sbr.rel (%p592) target = $region68
      $region67: #{tpu_custom_call.1} parent=5 // pred_region
        %s595 = ssub.s32 %s20, 2
        // Predicated region
        $region69: #{tpu_custom_call.1} parent=67 // pred_check
          %p596 = pneg %p224
        $region70: #{tpu_custom_call.1} parent=67 // pred_check_branch
          %598 = sbr.rel (%p596) target = $region72
        $region71: #{tpu_custom_call.1} parent=67 // pred_region
          %s599 = sand.u32 %s209, 1
          %s600 = scalar_lea.sflag [#allocation4], %s599
          %s601 = sand.u32 %s209, 1
          %s602 = smul.addr %s601, 16
          %s603 = scalar_lea.vmem [#allocation8], %s602
          %605 = dma.done %s600, 256
        $region72: #{tpu_custom_call.1} parent=67 // pred_fallthru
          _
      $region68: #{tpu_custom_call.1} parent=5 // pred_fallthru
        _
    $region6: #{tpu_custom_call.1} parent=1 // loop_footer
      %s24 = sadd.s32 1, %s20
    $region7: #{tpu_custom_call.1} parent=1 // loop_footer_branch
      %19 = sbr.rel target = $region3
    $region8: #{tpu_custom_call.1} parent=1 // loop_exit
      _
    %606 = vsyncpa [#allocation3], 1
    %s607 = scalar_lea.sflag [#allocation3], 1
    %608 = vsyncpa %s607, 1
    %609 = vsyncpa [#allocation6], 1
    %610 = vsyncpa [#allocation4], 1
    %s611 = scalar_lea.sflag [#allocation4], 1
    %612 = vsyncpa %s611, 1

</llo_original>
